<compile_context>
chip_gen: v7x
topology: tpu7x:2x2x1
jax: 0.10.0
libtpu: 0.0.40
codegen_flags: <defaults>
</compile_context>

<pallas_src>
import jax
import jax.numpy as jnp
from jax.experimental import pallas as pl
from jax.experimental.pallas import tpu as pltpu

_LANES = 128
_SUBLANES = 8
_ROW_ALIGN = 32        # sublane alignment safe for any input dtype down to 1 byte
_MAX_TILE_ROWS = 2048  # 2048*128*4B = 1 MiB per f32 tile -> ~4 MiB double-buffered
_NUM_STATS = 5         # [sum p, sum p^2, n_pos, sum_pos p, sum_pos p^2]
_PRED_PAD = -1.0e4     # sigmoid(-1e4) underflows to exactly 0 in f32


def _round_up(x, m):
    return -(-x // m) * m


def _contrastive_sums_kernel(pred_ref, true_ref, out_ref):
    """Accumulate 5 lane/sublane-wise partial sums into the resident (5,8,128) out block."""
    step = pl.program_id(1)

    @pl.when(step == 0)
    def _init():
        out_ref[...] = jnp.zeros_like(out_ref)

    q = pred_ref.shape[0] // _SUBLANES

    p = jax.nn.sigmoid(pred_ref[...].astype(jnp.float32))   # padded tail -> exactly 0
    pos = (true_ref[...] == 1).astype(jnp.float32)          # padded labels (0) never match
    p2 = p * p

    def vsum(x):
        # (tile_rows,128) -> (q,8,128) is layout-preserving (one vreg per slice), so the
        # axis-0 sum is pure VPU vreg accumulation; no cross-sublane XLU work per tile.
        return jnp.sum(x.reshape(q, _SUBLANES, _LANES), axis=0)

    out_ref[0] += vsum(p)
    out_ref[1] += vsum(p2)
    out_ref[2] += vsum(pos)
    out_ref[3] += vsum(p * pos)
    out_ref[4] += vsum(p2 * pos)


def contrastive_loss_optimized_v1(y_pred, y_true, epoch=0, margin=1.0,
                                  *, max_tile_rows=_MAX_TILE_ROWS):
    """JAX/Pallas equivalent of ContrastiveLossOptimizedV1.forward (margin/epoch unused)."""
    assert y_pred.shape == y_true.shape
    del epoch, margin  # not used by the forward math, same as the PyTorch module
    n = int(y_pred.size)
    assert n > 0

    # Lane-dense (rows, 128) layout; rows rounded so every tile is (tile_rows, 128)
    # with tile_rows a multiple of 32 (safe sublane tiling for any dtype).
    rows_min = max(-(-n // _LANES), 1)
    num_splits = 2 if rows_min > _ROW_ALIGN else 1      # v7x: 2 TCs; harmless on 1-TC chips
    blocks_per_split = -(-rows_min // (num_splits * max_tile_rows))
    blocks = num_splits * blocks_per_split
    tile_rows = _round_up(-(-rows_min // blocks), _ROW_ALIGN)
    rows_padded = blocks * tile_rows
    padded = rows_padded * _LANES

    pred_flat = jnp.reshape(y_pred, (-1,))
    true_flat = jnp.reshape(y_true, (-1,))
    if padded != n:
        # Single pad pass in the native dtypes: pred padded so sigmoid gives exactly 0,
        # labels padded with 0 (never matches `== 1`, and its p contribution is 0).
        pred_flat = jnp.pad(pred_flat, (0, padded - n), constant_values=_PRED_PAD)
        true_flat = jnp.pad(true_flat, (0, padded - n))
    pred2d = pred_flat.reshape(rows_padded, _LANES)      # free reshape (row-major)
    true2d = true_flat.reshape(rows_padded, _LANES)

    steps = blocks_per_split

    partials = pl.pallas_call(
        _contrastive_sums_kernel,
        out_shape=jax.ShapeDtypeStruct(
            (num_splits, _NUM_STATS, _SUBLANES, _LANES), jnp.float32),
        grid_spec=pltpu.PrefetchScalarGridSpec(
            num_scalar_prefetch=0,
            grid=(num_splits, steps),
            in_specs=[
                pl.BlockSpec((tile_rows, _LANES), lambda c, i, s=steps: (c * s + i, 0)),
                pl.BlockSpec((tile_rows, _LANES), lambda c, i, s=steps: (c * s + i, 0)),
            ],
            out_specs=pl.BlockSpec((None, _NUM_STATS, _SUBLANES, _LANES),
                                   lambda c, i: (c, 0, 0, 0)),
        ),
        compiler_params=pltpu.CompilerParams(
            dimension_semantics=("parallel", "arbitrary"),
        ),
    )(pred2d, true2d)

    # Tiny closed-form finalize on 5 scalars (plain JAX, so per-core partials need no
    # cross-core barrier inside the kernel).
    s = jnp.sum(partials, axis=(0, 2, 3))
    sum_p, sum_p2, n_pos, sp_pos, sp2_pos = s[0], s[1], s[2], s[3], s[4]

    n_f = jnp.float32(n)
    # Binary labels {0,1} assumed (same assumption the reference's pos/neg masks make).
    n_neg = n_f - n_pos
    sp_neg = sum_p - sp_pos
    sp2_neg = sum_p2 - sp2_pos

    # sum_{i,j}(p[j]-p[i])^2 and per-class sum of squared deviations, clamped at 0
    # against f32 cancellation.
    s_dist = jnp.maximum(2.0 * n_f * sum_p2 - 2.0 * sum_p * sum_p, 0.0)
    d_count = 2.0 * n_pos * n_neg                       # #{(i,j): t_i != t_j}
    pos_var = jnp.where(
        n_pos > 0.0,
        jnp.maximum(sp2_pos - sp_pos * sp_pos / jnp.maximum(n_pos, 1.0), 0.0), 0.0)
    neg_var = jnp.where(
        n_neg > 0.0,
        jnp.maximum(sp2_neg - sp_neg * sp_neg / jnp.maximum(n_neg, 1.0), 0.0), 0.0)
    var_term = pos_var + neg_var

    total = n_f * n_f
    return (d_count * s_dist + (total - d_count) * var_term) / total


def _reference_loss(y_pred, y_true):
    """Plain-JAX O(N^2) reference mirroring the PyTorch code exactly (for validation)."""
    p = jax.nn.sigmoid(y_pred.astype(jnp.float32)).reshape(-1)
    t = y_true.astype(jnp.float32).reshape(-1)
    dist = p[None, :] - p[:, None]
    ind = (t[None, :] != t[:, None]).astype(jnp.float32)
    s_dist = jnp.sum(dist ** 2)
    loss_diff = ind * s_dist
    pos = t == 1.0
    neg = t == 0.0
    mean_pos = jnp.sum(jnp.where(pos, p, 0.0)) / jnp.sum(pos.astype(jnp.float32))
    mean_neg = jnp.sum(jnp.where(neg, p, 0.0)) / jnp.sum(neg.astype(jnp.float32))
    var_term = (jnp.sum(jnp.where(pos, (p - mean_pos) ** 2, 0.0))
                + jnp.sum(jnp.where(neg, (p - mean_neg) ** 2, 0.0)))
    loss_same = (1.0 - ind) * var_term
    return jnp.mean(loss_diff) + jnp.mean(loss_same)


if __name__ == "__main__":
    key = jax.random.PRNGKey(0)
    keys = jax.random.split(key, 8)

    def make_case(kp, kt, shape, label_dtype=jnp.float32):
        y_pred = jax.random.normal(kp, shape, dtype=jnp.float32)
        y_true = jax.random.bernoulli(kt, p=0.5, shape=shape).astype(label_dtype)
        # Make sure both classes are present (otherwise the torch loss degenerates).
        y_true = y_true.reshape(-1).at[0].set(1).at[1].set(0).reshape(shape)
        return y_pred, y_true

    def check(y_pred, y_true, **kw):
        loss = jax.block_until_ready(
            contrastive_loss_optimized_v1(y_pred, y_true, epoch=0, **kw))
        ref = jax.block_until_ready(_reference_loss(y_pred, y_true))
        assert jnp.allclose(loss, ref, rtol=5e-3, atol=1e-2), (loss, ref)

    # 1) batch=2, features=64 -> N=128 (single tile, padded tail).
    check(*make_case(keys[0], keys[1], (2, 64)))
    # 2) Ragged N=150 (not a multiple of 128) -> exercises the tail pad.
    check(*make_case(keys[2], keys[3], (3, 50)))
    # 3) N=4096 -> no-pad fast path; bf16 labels streamed in their native dtype.
    check(*make_case(keys[4], keys[5], (4, 1024), label_dtype=jnp.bfloat16))
    # 4) N=4224 with a tiny tile -> 2-way split x 3 steps (multi-core / multi-step path).
    check(*make_case(keys[6], keys[7], (4, 1056)), max_tile_rows=8)

    print("KERNEL_OK")
</pallas_src>

<mosaic_0001>
module attributes {stable_mosaic.version = 11 : i64} {
  func.func @_contrastive_sums_kernel(%arg0: i32, %arg1: i32, %arg2: memref<32x128xf32, #tpu.memory_space<vmem>>, %arg3: memref<32x128xf32, #tpu.memory_space<vmem>>, %arg4: memref<1x5x8x128xf32, #tpu.memory_space<vmem>>) attributes {dimension_semantics = [#tpu.dimension_semantics<parallel>, #tpu.dimension_semantics<arbitrary>], iteration_bounds = array<i64: 1, 1>, scalar_prefetch = 0 : i64, scratch_operands = 0 : i64, tpu.core_type = #tpu.core_type<tc>, window_params = [{transform_indices = @transform_0, window_bounds = array<i64: 32, 128>}, {transform_indices = @transform_1, window_bounds = array<i64: 32, 128>}, {transform_indices = @transform_2, window_bounds = array<i64: 1, 5, 8, 128>}]} {
    %c0_i32 = arith.constant 0 : i32
    %0 = arith.cmpi eq, %arg1, %c0_i32 : i32
    %1 = arith.extui %0 : i1 to i32
    %c0_i32_0 = arith.constant 0 : i32
    %2 = arith.cmpi ne, %1, %c0_i32_0 : i32
    scf.if %2 {
      %cst_46 = arith.constant 0.000000e+00 : f32
      %57 = vector.broadcast %cst_46 : f32 to vector<5x8x128xf32>
      %c0_47 = arith.constant 0 : index
      %c0_48 = arith.constant 0 : index
      %c0_49 = arith.constant 0 : index
      %c0_50 = arith.constant 0 : index
      %58 = vector.load %arg4[%c0_47, %c0_48, %c0_49, %c0_50] : memref<1x5x8x128xf32, #tpu.memory_space<vmem>>, vector<1x5x8x128xf32>
      %59 = vector.shape_cast %58 : vector<1x5x8x128xf32> to vector<5x8x128xf32>
      %60 = vector.shape_cast %57 : vector<5x8x128xf32> to vector<1x5x8x128xf32>
      tpu.vector_store %arg4[%c0_47, %c0_48, %c0_49, %c0_50], %60 {strides = array<i32>} : memref<1x5x8x128xf32, #tpu.memory_space<vmem>>, vector<1x5x8x128xf32>,
    } else {
    }
    %c0 = arith.constant 0 : index
    %c0_1 = arith.constant 0 : index
    %3 = vector.load %arg2[%c0, %c0_1] : memref<32x128xf32, #tpu.memory_space<vmem>>, vector<32x128xf32>
    %4 = arith.negf %3 : vector<32x128xf32>
    %5 = math.exp %4 : vector<32x128xf32>
    %cst = arith.constant 1.000000e+00 : f32
    %6 = vector.broadcast %cst : f32 to vector<32x128xf32>
    %7 = arith.addf %6, %5 : vector<32x128xf32>
    %8 = arith.divf %6, %7 : vector<32x128xf32>
    %c0_2 = arith.constant 0 : index
    %c0_3 = arith.constant 0 : index
    %9 = vector.load %arg3[%c0_2, %c0_3] : memref<32x128xf32, #tpu.memory_space<vmem>>, vector<32x128xf32>
    %cst_4 = arith.constant 1.000000e+00 : f32
    %10 = vector.broadcast %cst_4 : f32 to vector<32x128xf32>
    %11 = arith.cmpf oeq, %9, %10 : vector<32x128xf32>
    %12 = arith.extui %11 : vector<32x128xi1> to vector<32x128xi32>
    %13 = arith.sitofp %12 : vector<32x128xi32> to vector<32x128xf32>
    %14 = arith.mulf %8, %8 : vector<32x128xf32>
    %c0_5 = arith.constant 0 : index
    %c0_6 = arith.constant 0 : index
    %c0_7 = arith.constant 0 : index
    %c0_8 = arith.constant 0 : index
    %15 = vector.load %arg4[%c0_5, %c0_6, %c0_7, %c0_8] : memref<1x5x8x128xf32, #tpu.memory_space<vmem>>, vector<1x1x8x128xf32>
    %16 = vector.shape_cast %15 : vector<1x1x8x128xf32> to vector<8x128xf32>
    %17 = vector.shape_cast %8 : vector<32x128xf32> to vector<4x8x128xf32>
    %cst_9 = arith.constant dense<0.000000e+00> : vector<8x128xf32>
    %18 = vector.multi_reduction <add>, %17, %cst_9 [0] : vector<4x8x128xf32> to vector<8x128xf32>
    %19 = arith.addf %16, %18 : vector<8x128xf32>
    %c0_10 = arith.constant 0 : index
    %c0_11 = arith.constant 0 : index
    %c0_12 = arith.constant 0 : index
    %c0_13 = arith.constant 0 : index
    %20 = vector.load %arg4[%c0_10, %c0_11, %c0_12, %c0_13] : memref<1x5x8x128xf32, #tpu.memory_space<vmem>>, vector<1x1x8x128xf32>
    %21 = vector.shape_cast %20 : vector<1x1x8x128xf32> to vector<8x128xf32>
    %22 = vector.shape_cast %19 : vector<8x128xf32> to vector<1x1x8x128xf32>
    tpu.vector_store %arg4[%c0_10, %c0_11, %c0_12, %c0_13], %22 {strides = array<i32>} : memref<1x5x8x128xf32, #tpu.memory_space<vmem>>, vector<1x1x8x128xf32>,
    %c0_14 = arith.constant 0 : index
    %c1 = arith.constant 1 : index
    %c0_15 = arith.constant 0 : index
    %c0_16 = arith.constant 0 : index
    %23 = vector.load %arg4[%c0_14, %c1, %c0_15, %c0_16] : memref<1x5x8x128xf32, #tpu.memory_space<vmem>>, vector<1x1x8x128xf32>
    %24 = vector.shape_cast %23 : vector<1x1x8x128xf32> to vector<8x128xf32>
    %25 = vector.shape_cast %14 : vector<32x128xf32> to vector<4x8x128xf32>
    %cst_17 = arith.constant dense<0.000000e+00> : vector<8x128xf32>
    %26 = vector.multi_reduction <add>, %25, %cst_17 [0] : vector<4x8x128xf32> to vector<8x128xf32>
    %27 = arith.addf %24, %26 : vector<8x128xf32>
    %c0_18 = arith.constant 0 : index
    %c1_19 = arith.constant 1 : index
    %c0_20 = arith.constant 0 : index
    %c0_21 = arith.constant 0 : index
    %28 = vector.load %arg4[%c0_18, %c1_19, %c0_20, %c0_21] : memref<1x5x8x128xf32, #tpu.memory_space<vmem>>, vector<1x1x8x128xf32>
    %29 = vector.shape_cast %28 : vector<1x1x8x128xf32> to vector<8x128xf32>
    %30 = vector.shape_cast %27 : vector<8x128xf32> to vector<1x1x8x128xf32>
    tpu.vector_store %arg4[%c0_18, %c1_19, %c0_20, %c0_21], %30 {strides = array<i32>} : memref<1x5x8x128xf32, #tpu.memory_space<vmem>>, vector<1x1x8x128xf32>,
    %c0_22 = arith.constant 0 : index
    %c2 = arith.constant 2 : index
    %c0_23 = arith.constant 0 : index
    %c0_24 = arith.constant 0 : index
    %31 = vector.load %arg4[%c0_22, %c2, %c0_23, %c0_24] : memref<1x5x8x128xf32, #tpu.memory_space<vmem>>, vector<1x1x8x128xf32>
    %32 = vector.shape_cast %31 : vector<1x1x8x128xf32> to vector<8x128xf32>
    %33 = vector.shape_cast %13 : vector<32x128xf32> to vector<4x8x128xf32>
    %cst_25 = arith.constant dense<0.000000e+00> : vector<8x128xf32>
    %34 = vector.multi_reduction <add>, %33, %cst_25 [0] : vector<4x8x128xf32> to vector<8x128xf32>
    %35 = arith.addf %32, %34 : vector<8x128xf32>
    %c0_26 = arith.constant 0 : index
    %c2_27 = arith.constant 2 : index
    %c0_28 = arith.constant 0 : index
    %c0_29 = arith.constant 0 : index
    %36 = vector.load %arg4[%c0_26, %c2_27, %c0_28, %c0_29] : memref<1x5x8x128xf32, #tpu.memory_space<vmem>>, vector<1x1x8x128xf32>
    %37 = vector.shape_cast %36 : vector<1x1x8x128xf32> to vector<8x128xf32>
    %38 = vector.shape_cast %35 : vector<8x128xf32> to vector<1x1x8x128xf32>
    tpu.vector_store %arg4[%c0_26, %c2_27, %c0_28, %c0_29], %38 {strides = array<i32>} : memref<1x5x8x128xf32, #tpu.memory_space<vmem>>, vector<1x1x8x128xf32>,
    %c0_30 = arith.constant 0 : index
    %c3 = arith.constant 3 : index
    %c0_31 = arith.constant 0 : index
    %c0_32 = arith.constant 0 : index
    %39 = vector.load %arg4[%c0_30, %c3, %c0_31, %c0_32] : memref<1x5x8x128xf32, #tpu.memory_space<vmem>>, vector<1x1x8x128xf32>
    %40 = vector.shape_cast %39 : vector<1x1x8x128xf32> to vector<8x128xf32>
    %41 = arith.mulf %8, %13 : vector<32x128xf32>
    %42 = vector.shape_cast %41 : vector<32x128xf32> to vector<4x8x128xf32>
    %cst_33 = arith.constant dense<0.000000e+00> : vector<8x128xf32>
    %43 = vector.multi_reduction <add>, %42, %cst_33 [0] : vector<4x8x128xf32> to vector<8x128xf32>
    %44 = arith.addf %40, %43 : vector<8x128xf32>
    %c0_34 = arith.constant 0 : index
    %c3_35 = arith.constant 3 : index
    %c0_36 = arith.constant 0 : index
    %c0_37 = arith.constant 0 : index
    %45 = vector.load %arg4[%c0_34, %c3_35, %c0_36, %c0_37] : memref<1x5x8x128xf32, #tpu.memory_space<vmem>>, vector<1x1x8x128xf32>
    %46 = vector.shape_cast %45 : vector<1x1x8x128xf32> to vector<8x128xf32>
    %47 = vector.shape_cast %44 : vector<8x128xf32> to vector<1x1x8x128xf32>
    tpu.vector_store %arg4[%c0_34, %c3_35, %c0_36, %c0_37], %47 {strides = array<i32>} : memref<1x5x8x128xf32, #tpu.memory_space<vmem>>, vector<1x1x8x128xf32>,
    %c0_38 = arith.constant 0 : index
    %c4 = arith.constant 4 : index
    %c0_39 = arith.constant 0 : index
    %c0_40 = arith.constant 0 : index
    %48 = vector.load %arg4[%c0_38, %c4, %c0_39, %c0_40] : memref<1x5x8x128xf32, #tpu.memory_space<vmem>>, vector<1x1x8x128xf32>
    %49 = vector.shape_cast %48 : vector<1x1x8x128xf32> to vector<8x128xf32>
    %50 = arith.mulf %14, %13 : vector<32x128xf32>
    %51 = vector.shape_cast %50 : vector<32x128xf32> to vector<4x8x128xf32>
    %cst_41 = arith.constant dense<0.000000e+00> : vector<8x128xf32>
    %52 = vector.multi_reduction <add>, %51, %cst_41 [0] : vector<4x8x128xf32> to vector<8x128xf32>
    %53 = arith.addf %49, %52 : vector<8x128xf32>
    %c0_42 = arith.constant 0 : index
    %c4_43 = arith.constant 4 : index
    %c0_44 = arith.constant 0 : index
    %c0_45 = arith.constant 0 : index
    %54 = vector.load %arg4[%c0_42, %c4_43, %c0_44, %c0_45] : memref<1x5x8x128xf32, #tpu.memory_space<vmem>>, vector<1x1x8x128xf32>
    %55 = vector.shape_cast %54 : vector<1x1x8x128xf32> to vector<8x128xf32>
    %56 = vector.shape_cast %53 : vector<8x128xf32> to vector<1x1x8x128xf32>
    tpu.vector_store %arg4[%c0_42, %c4_43, %c0_44, %c0_45], %56 {strides = array<i32>} : memref<1x5x8x128xf32, #tpu.memory_space<vmem>>, vector<1x1x8x128xf32>,
    return
  }
  func.func @transform_0(%arg0: i32, %arg1: i32) -> (i32, i32) {
    %c1_i32 = arith.constant 1 : i32
    %0 = arith.muli %arg0, %c1_i32 : i32
    %1 = arith.addi %0, %arg1 : i32
    %c0_i32 = arith.constant 0 : i32
    %c0_i32_0 = arith.constant 0 : i32
    return %1, %c0_i32 : i32, i32
  }
  func.func @transform_1(%arg0: i32, %arg1: i32) -> (i32, i32) {
    %c1_i32 = arith.constant 1 : i32
    %0 = arith.muli %arg0, %c1_i32 : i32
    %1 = arith.addi %0, %arg1 : i32
    %c0_i32 = arith.constant 0 : i32
    %c0_i32_0 = arith.constant 0 : i32
    return %1, %c0_i32 : i32, i32
  }
  func.func @transform_2(%arg0: i32, %arg1: i32) -> (i32, i32, i32, i32) {
    %c0_i32 = arith.constant 0 : i32
    %c0_i32_0 = arith.constant 0 : i32
    %c0_i32_1 = arith.constant 0 : i32
    %c0_i32_2 = arith.constant 0 : i32
    return %arg0, %c0_i32, %c0_i32_0, %c0_i32_1 : i32, i32, i32, i32
  }
}

</mosaic_0001>

<llo_original>
// kernel: tpu_custom_call.1
$region0: #{tpu_custom_call.1}
  #allocation0 [shape = 'u32[]', space=smem, size = 0x4, offset = 0x4, fixed_abs, tag = 'smem constant byte address 0x4 - core index']
  #allocation1 [shape = 'u32[144,128]{1,0:T(1,128)}', space=vmem, size = 0x12000, scoped, tag = 'internal scratch']
  %s0 = inlined_call_operand.hbm [shape: f32[32,128], index: 0, kind: input, shape index: {}]
  %s1 = inlined_call_operand.hbm [shape: f32[32,128], index: 1, kind: input, shape index: {}]
  %s2 = inlined_call_operand.hbm [shape: f32[1,5,8,128], index: 2, kind: output, shape index: {}]
  %s3 = sld [smem:[#allocation0]]
  $region30: #{tpu_custom_call.1} parent=0
    _
  %s5 = ssub.s32 1, %s3
  %s6 = scalar_select 0, %s5, %s3
  $region1: #{tpu_custom_call.1} parent=0
    #allocation2 [shape = 'u8[16384]{0}', space=vmem, size = 0x4000, scoped, tag = 'input window, operand 0, single buffered']
    #allocation3 [shape = 's32[1]{0}', space=sflag, size = 0x4, scoped, tag = 'scoped memory for tpu_custom_call.1']
    #allocation4 [shape = 's32[1]{0}', space=sflag, size = 0x4, scoped, tag = 'scoped memory for tpu_custom_call.1']
    #allocation5 [shape = 'u8[16384]{0}', space=vmem, size = 0x4000, scoped, tag = 'input window, operand 1, single buffered']
    #allocation6 [shape = 's32[1]{0}', space=sflag, size = 0x4, scoped, tag = 'scoped memory for tpu_custom_call.1']
    #allocation7 [shape = 'u8[20480]{0}', space=vmem, size = 0x5000, scoped, tag = 'output window, operand 0, single buffered']
    %7 = vsyncpa [#allocation3], 0
    %8 = vsyncpa [#allocation6], 0
    %9 = vsyncpa [#allocation4], 0
    // Predicated region
    $region2: #{tpu_custom_call.1} parent=1 // pred_check
      _
    $region3: #{tpu_custom_call.1} parent=1 // pred_check_branch
      %11 = sbr.rel (0) target = $region5
    $region4: #{tpu_custom_call.1} parent=1 // pred_region
      %s12 = sadd.s32 0, 0
      %s13 = smul.u32 4, %s12
      %s15 = ssub.s32 512, 512
      %16 = vsyncadd [#allocation3], %s15
      %s17 = smul.addr %s13, 128
      %s18 = scalar_lea.hbm %s0, %s17
      %s19 = sshll.u32 [#allocation2], 4
      %s20 = int_to_ptr.vmem [resolvable:$true] %s19
      %25 = dma.hbm_to_vmem [thread:$0]  %s18, 512, %s20, [#allocation3], 128, 128, 8
    $region5: #{tpu_custom_call.1} parent=1 // pred_fallthru
      _
    // Predicated region
    $region6: #{tpu_custom_call.1} parent=1 // pred_check
      _
    $region7: #{tpu_custom_call.1} parent=1 // pred_check_branch
      %27 = sbr.rel (0) target = $region9
    $region8: #{tpu_custom_call.1} parent=1 // pred_region
      %s28 = sadd.s32 0, 0
      %s29 = smul.u32 4, %s28
      %s31 = ssub.s32 512, 512
      %32 = vsyncadd [#allocation6], %s31
      %s33 = smul.addr %s29, 128
      %s34 = scalar_lea.hbm %s1, %s33
      %s35 = sshll.u32 [#allocation5], 4
      %s36 = int_to_ptr.vmem [resolvable:$true] %s35
      %41 = dma.hbm_to_vmem [thread:$0]  %s34, 512, %s36, [#allocation6], 128, 128, 8
    $region9: #{tpu_custom_call.1} parent=1 // pred_fallthru
      _
    // Predicated region
    $region10: #{tpu_custom_call.1} parent=1 // pred_check
      _
    $region11: #{tpu_custom_call.1} parent=1 // pred_check_branch
      %43 = sbr.rel (0) target = $region13
    $region12: #{tpu_custom_call.1} parent=1 // pred_region
      %44 = dma.done [#allocation3], 512
    $region13: #{tpu_custom_call.1} parent=1 // pred_fallthru
      _
    // Predicated region
    $region14: #{tpu_custom_call.1} parent=1 // pred_check
      _
    $region15: #{tpu_custom_call.1} parent=1 // pred_check_branch
      %46 = sbr.rel (0) target = $region17
    $region16: #{tpu_custom_call.1} parent=1 // pred_region
      %47 = dma.done [#allocation6], 512
    $region17: #{tpu_custom_call.1} parent=1 // pred_fallthru
      _
    %s48 = sadd.s32 0, 0
    %s49 = smul.u32 4, %s48
    %s50 = sadd.s32 0, 0
    %s51 = smul.u32 4, %s50
    %p52 = scmp.eq.s32.totalorder 0, 0
    // Predicated region
    $region18: #{tpu_custom_call.1} parent=1 // pred_check
      %p53 = pneg %p52
    $region19: #{tpu_custom_call.1} parent=1 // pred_check_branch
      %55 = sbr.rel (%p53) target = $region21
    $region20: #{tpu_custom_call.1} parent=1 // pred_region
      %56 = vst [vmem:[#allocation7] sm:$0xff] 0.0
      %57 = vst [vmem:[#allocation7 + $0x8] sm:$0xff] 0.0
      %58 = vst [vmem:[#allocation7 + $0x10] sm:$0xff] 0.0
      %59 = vst [vmem:[#allocation7 + $0x18] sm:$0xff] 0.0
      %60 = vst [vmem:[#allocation7 + $0x20] sm:$0xff] 0.0
    $region21: #{tpu_custom_call.1} parent=1 // pred_fallthru
      _
    %v61 = vld [vmem:[#allocation2] sm:$0xff]
    %v62 = vld [vmem:[#allocation2 + $0x8] sm:$0xff]
    %v63 = vld [vmem:[#allocation2 + $0x10] sm:$0xff]
    %v64 = vld [vmem:[#allocation2 + $0x18] sm:$0xff]
    %v65 = vxor.u32 %v61, 2147483648
    %v66 = vxor.u32 %v62, 2147483648
    %v67 = vxor.u32 %v63, 2147483648
    %v68 = vxor.u32 %v64, 2147483648
    %v69 = vmul.f32 %v65, 1.442695
    %v70 = vpow.pop %v69
    %v71 = vmul.f32 %v66, 1.442695
    %v72 = vpow.pop %v71
    %v73 = vmul.f32 %v67, 1.442695
    %v74 = vpow.pop %v73
    %v75 = vmul.f32 %v68, 1.442695
    %v76 = vpow.pop %v75
    %v77 = vadd.f32 %v70, 1.0
    %v78 = vadd.f32 %v72, 1.0
    %v79 = vadd.f32 %v74, 1.0
    %v80 = vadd.f32 %v76, 1.0
    %v81 = vrcp.pop %v77
    %v82 = vmul.f32 1.0, %v81
    %v83 = vrcp.pop %v78
    %v84 = vmul.f32 1.0, %v83
    %v85 = vrcp.pop %v79
    %v86 = vmul.f32 1.0, %v85
    %v87 = vrcp.pop %v80
    %v88 = vmul.f32 1.0, %v87
    %v89 = vld [vmem:[#allocation5] sm:$0xff]
    %v90 = vld [vmem:[#allocation5 + $0x8] sm:$0xff]
    %v91 = vld [vmem:[#allocation5 + $0x10] sm:$0xff]
    %v92 = vld [vmem:[#allocation5 + $0x18] sm:$0xff]
    %vm93 = vcmp.eq.f32.partialorder %v89, 1.0
    %vm94 = vcmp.eq.f32.partialorder %v90, 1.0
    %vm95 = vcmp.eq.f32.partialorder %v91, 1.0
    %vm96 = vcmp.eq.f32.partialorder %v92, 1.0
    %v97 = vsel %vm93, 1, 0
    %v98 = vsel %vm94, 1, 0
    %v99 = vsel %vm95, 1, 0
    %v100 = vsel %vm96, 1, 0
    %v101 = vcvt.s32.f32 %v97
    %v102 = vcvt.s32.f32 %v98
    %v103 = vcvt.s32.f32 %v99
    %v104 = vcvt.s32.f32 %v100
    %v105 = vmul.f32 %v82, %v82
    %v106 = vmul.f32 %v84, %v84
    %v107 = vmul.f32 %v86, %v86
    %v108 = vmul.f32 %v88, %v88
    %v109 = vld [vmem:[#allocation7] sm:$0xff]
    %v110 = vadd.f32 %v82, %v84
    %v111 = vadd.f32 %v110, %v86
    %v112 = vadd.f32 %v111, %v88
    %v113 = vadd.f32 %v109, %v112
    %114 = vst [vmem:[#allocation7] sm:$0xff] %v113
    %s115 = scalar_lea.vmem [#allocation7], 8
    %v116 = vld [vmem:[%s115] sm:$0xff]
    %v117 = vadd.f32 %v105, %v106
    %v118 = vadd.f32 %v117, %v107
    %v119 = vadd.f32 %v118, %v108
    %v120 = vadd.f32 %v116, %v119
    %121 = vst [vmem:[%s115] sm:$0xff] %v120
    %s122 = scalar_lea.vmem [#allocation7], 16
    %v123 = vld [vmem:[%s122] sm:$0xff]
    %v124 = vadd.f32 %v101, %v102
    %v125 = vadd.f32 %v124, %v103
    %v126 = vadd.f32 %v125, %v104
    %v127 = vadd.f32 %v123, %v126
    %128 = vst [vmem:[%s122] sm:$0xff] %v127
    %s129 = scalar_lea.vmem [#allocation7], 24
    %v130 = vld [vmem:[%s129] sm:$0xff]
    %v131 = vmul.f32 %v82, %v101
    %v132 = vmul.f32 %v84, %v102
    %v133 = vmul.f32 %v86, %v103
    %v134 = vmul.f32 %v88, %v104
    %v135 = vadd.f32 %v131, %v132
    %v136 = vadd.f32 %v135, %v133
    %v137 = vadd.f32 %v136, %v134
    %v138 = vadd.f32 %v130, %v137
    %139 = vst [vmem:[%s129] sm:$0xff] %v138
    %s140 = scalar_lea.vmem [#allocation7], 32
    %v141 = vld [vmem:[%s140] sm:$0xff]
    %v142 = vmul.f32 %v105, %v101
    %v143 = vmul.f32 %v106, %v102
    %v144 = vmul.f32 %v107, %v103
    %v145 = vmul.f32 %v108, %v104
    %v146 = vadd.f32 %v142, %v143
    %v147 = vadd.f32 %v146, %v144
    %v148 = vadd.f32 %v147, %v145
    %v149 = vadd.f32 %v141, %v148
    %150 = vst [vmem:[%s140] sm:$0xff] %v149
    // Predicated region
    $region22: #{tpu_custom_call.1} parent=1 // pred_check
      _
    $region23: #{tpu_custom_call.1} parent=1 // pred_check_branch
      %152 = sbr.rel (0) target = $region25
    $region24: #{tpu_custom_call.1} parent=1 // pred_region
      %s154 = ssub.s32 640, 640
      %155 = vsyncadd [#allocation4], %s154
      %s156 = sshll.u32 [#allocation7], 4
      %s157 = int_to_ptr.vmem [resolvable:$true] %s156
      %162 = dma.vmem_to_hbm [thread:$0]  %s157, 640, %s2, [#allocation4], 128, 128, 8
    $region25: #{tpu_custom_call.1} parent=1 // pred_fallthru
      _
    // Predicated region
    $region26: #{tpu_custom_call.1} parent=1 // pred_check
      _
    $region27: #{tpu_custom_call.1} parent=1 // pred_check_branch
      %164 = sbr.rel (0) target = $region29
    $region28: #{tpu_custom_call.1} parent=1 // pred_region
      %165 = dma.done [#allocation4], 640
    $region29: #{tpu_custom_call.1} parent=1 // pred_fallthru
      _
    %166 = vsyncpa [#allocation3], 1
    %167 = vsyncpa [#allocation6], 1
    %168 = vsyncpa [#allocation4], 1

</llo_original>
